<compile_context>
chip_gen: v7x
topology: tpu7x:2x2x1
jax: 0.10.0
libtpu: 0.0.40
codegen_flags: <defaults>
</compile_context>

<pallas_src>
import jax
import jax.numpy as jnp
from jax import lax
from jax.experimental import pallas as pl
from jax.experimental.pallas import tpu as pltpu

LANE = 128     # lane width (last-dim granularity)
SUBLANE = 8    # sublane width (second-to-last dim granularity)


def _round_up(n, m):
    return (n + m - 1) // m * m


def _pad_to(a, shape):
    pads = [(0, s - d) for d, s in zip(a.shape, shape)]
    return jnp.pad(a, pads)


def _vmem_limit_bytes():
    # Derive the scoped-VMEM limit from the chip instead of hardcoding:
    # ~48 MiB on v7x (64 MiB physical), capped at 100 MiB on v5e/v6e (128 MiB).
    try:
        cap = getattr(pltpu.get_tpu_info(), "vmem_capacity_bytes",
                      64 * 1024 * 1024)
    except Exception:
        cap = 64 * 1024 * 1024
    return int(min(cap * 3 // 4, 100 * 1024 * 1024))


_VMEM_LIMIT = _vmem_limit_bytes()


# --------------------------------------------------------------------------- #
# Kernel 1/3 & 3/3: row-parallel projection  y = x @ w + b
# --------------------------------------------------------------------------- #
def _proj_kernel(x_ref, w_ref, b_ref, o_ref):
    y = (jnp.dot(x_ref[...], w_ref[...], preferred_element_type=jnp.float32)
         + b_ref[...])
    o_ref[...] = y.astype(o_ref.dtype)


def _project(x2d, w, b, out_dtype, row_tile):
    """x2d: (R, K) bf16, w: (K, N) bf16, b: (1, N) f32 -> (R, N) out_dtype."""
    R, K = x2d.shape
    N = w.shape[1]
    return pl.pallas_call(
        _proj_kernel,
        out_shape=jax.ShapeDtypeStruct((R, N), out_dtype),
        grid_spec=pltpu.PrefetchScalarGridSpec(
            num_scalar_prefetch=0,
            grid=(R // row_tile,),
            in_specs=[
                pl.BlockSpec((row_tile, K), lambda r: (r, 0)),
                pl.BlockSpec((K, N), lambda r: (0, 0)),   # resident weight
                pl.BlockSpec((1, N), lambda r: (0, 0)),   # resident bias
            ],
            out_specs=pl.BlockSpec((row_tile, N), lambda r: (r, 0)),
        ),
        compiler_params=pltpu.CompilerParams(
            dimension_semantics=("parallel",),
            vmem_limit_bytes=_VMEM_LIMIT,
        ),
    )(x2d, w, b)


# --------------------------------------------------------------------------- #
# Kernel 2/3: the serial recurrence.  One grid step == TC timesteps.
# --------------------------------------------------------------------------- #
def _rnn_recurrence_kernel(xw1_ref, h0_ref, w1h_ref, hall_ref, carry_ref):
    # carry_ref (bf16 VMEM scratch) persists across grid steps.
    @pl.when(pl.program_id(0) == 0)
    def _():
        carry_ref[...] = h0_ref[...]

    chunk = xw1_ref.shape[0]
    w1h = w1h_ref[...]                      # loaded once per grid step

    def step(t, h):                         # h: bf16 (Bp, Hp) vreg carry
        pre = xw1_ref[t] + jnp.dot(h, w1h, preferred_element_type=jnp.float32)
        h_f32 = jnp.maximum(pre, 0.0)       # ReLU in f32
        hall_ref[t] = h_f32.astype(hall_ref.dtype)
        return h_f32.astype(jnp.bfloat16)

    carry_ref[...] = lax.fori_loop(0, chunk, step, carry_ref[...], unroll=True)


def _recurrence(xw1, h0, w1h, chunk):
    """xw1: (Tp,Bp,Hp) f32, h0: (Bp,Hp) bf16, w1h: (Hp,Hp) bf16 -> h_all bf16."""
    Tp, Bp, Hp = xw1.shape
    return pl.pallas_call(
        _rnn_recurrence_kernel,
        out_shape=jax.ShapeDtypeStruct((Tp, Bp, Hp), jnp.bfloat16),
        grid_spec=pltpu.PrefetchScalarGridSpec(
            num_scalar_prefetch=0,
            grid=(Tp // chunk,),
            in_specs=[
                pl.BlockSpec((chunk, Bp, Hp), lambda c: (c, 0, 0)),  # xw1 chunk
                pl.BlockSpec((Bp, Hp), lambda c: (0, 0)),            # h0 (resident)
                pl.BlockSpec((Hp, Hp), lambda c: (0, 0)),            # W1h (resident)
            ],
            out_specs=pl.BlockSpec((chunk, Bp, Hp), lambda c: (c, 0, 0)),
            scratch_shapes=[pltpu.VMEM((Bp, Hp), jnp.bfloat16)],      # carry
        ),
        compiler_params=pltpu.CompilerParams(
            dimension_semantics=("arbitrary",),   # true recurrence over time
            vmem_limit_bytes=_VMEM_LIMIT,
        ),
    )(xw1, h0, w1h)


# --------------------------------------------------------------------------- #
# Wrappers
# --------------------------------------------------------------------------- #
@jax.jit
def rnn_forward_seq(x_seq, h0, params):
    """Run the RNN cell over a whole sequence.

    x_seq : (T, B, input_size) f32
    h0    : (B, hidden_size)   f32
    returns (outputs (T, B, output_size) f32, h_final (B, hidden_size) f32)
    Note: the hidden carry is bf16 (bf16 operands / f32 accumulation contract).
    """
    w1x, w1h, b1, w2, b2 = params
    T, B, I = x_seq.shape
    H = w1h.shape[0]
    O = w2.shape[1]

    TC = min(T, 16)                      # timesteps per serial grid step
    Tp = _round_up(T, TC)
    Bp = _round_up(B, SUBLANE)
    Ip = _round_up(I, LANE)
    Hp = _round_up(H, LANE)
    Op = _round_up(O, LANE)

    # Zero-pad to hardware granularity; bf16 operands for the MXU.
    x_p = _pad_to(x_seq, (Tp, Bp, Ip)).astype(jnp.bfloat16)
    h0_p = _pad_to(h0, (Bp, Hp)).astype(jnp.bfloat16)
    w1x_p = _pad_to(w1x, (Ip, Hp)).astype(jnp.bfloat16)
    w1h_p = _pad_to(w1h, (Hp, Hp)).astype(jnp.bfloat16)
    b1_p = _pad_to(b1, (1, Hp)).astype(jnp.float32)
    w2_p = _pad_to(w2, (Hp, Op)).astype(jnp.bfloat16)
    b2_p = _pad_to(b2, (1, Op)).astype(jnp.float32)

    row_tile = TC * Bp                   # rows per projection grid step

    # 1) Hoisted input projection over all T*B rows (parallel, MXU-dense).
    xw1 = _project(x_p.reshape(Tp * Bp, Ip), w1x_p, b1_p, jnp.float32,
                   row_tile).reshape(Tp, Bp, Hp)

    # 2) Serial recurrence: only h @ W1h + add + ReLU sits on the chain.
    h_all = _recurrence(xw1, h0_p, w1h_p, TC)          # (Tp, Bp, Hp) bf16

    # 3) Hoisted output projection over all T*B rows.
    out = _project(h_all.reshape(Tp * Bp, Hp), w2_p, b2_p, jnp.float32,
                   row_tile).reshape(Tp, Bp, Op)

    h_final = h_all[T - 1, :B, :H].astype(jnp.float32)
    return out[:T, :B, :O], h_final


def rnn_forward(x, hidden, params):
    """Equivalent of RNN.forward(x, hidden) -> (output, h) (single step)."""
    out_seq, h = rnn_forward_seq(x[None], hidden, params)
    return out_seq[0], h


def init_params(key, input_size, hidden_size, output_size):
    """Deterministic init mimicking nn.Linear (uniform +/- 1/sqrt(fan_in))."""
    k1, k2, k3, k4 = jax.random.split(key, 4)
    fan1 = input_size + hidden_size
    bound1 = 1.0 / jnp.sqrt(fan1)
    # PyTorch weight is [out, in]; store transposed [in, out] for right-multiply.
    w1 = jax.random.uniform(k1, (hidden_size, fan1), jnp.float32, -bound1, bound1)
    b1 = jax.random.uniform(k2, (1, hidden_size), jnp.float32, -bound1, bound1)
    bound2 = 1.0 / jnp.sqrt(hidden_size)
    w2 = jax.random.uniform(k3, (output_size, hidden_size), jnp.float32, -bound2, bound2)
    b2 = jax.random.uniform(k4, (1, output_size), jnp.float32, -bound2, bound2)
    w1x = w1[:, :input_size].T          # [input_size, hidden_size]
    w1h = w1[:, input_size:].T          # [hidden_size, hidden_size]
    w2t = w2.T                          # [hidden_size, output_size]
    return w1x, w1h, b1, w2t, b2


# --------------------------------------------------------------------------- #
# Pure-JAX reference matching the kernel's bf16-operand / f32-accumulate math
# (hidden carry quantized to bf16, as in the kernel).
# --------------------------------------------------------------------------- #
def _ref_step(x, h_bf16, params):
    w1x, w1h, b1, w2, b2 = params
    xw1 = (jnp.dot(x.astype(jnp.bfloat16), w1x.astype(jnp.bfloat16),
                   preferred_element_type=jnp.float32) + b1)
    pre = xw1 + jnp.dot(h_bf16, w1h.astype(jnp.bfloat16),
                        preferred_element_type=jnp.float32)
    h_new = jnp.maximum(pre, 0.0).astype(jnp.bfloat16)
    out = (jnp.dot(h_new, w2.astype(jnp.bfloat16),
                   preferred_element_type=jnp.float32) + b2)
    return out, h_new


if __name__ == "__main__":
    input_size, hidden_size, output_size = 16, 32, 8
    batch, seq_len = 2, 8

    key = jax.random.PRNGKey(0)
    kx, kp = jax.random.split(key)
    x_seq = jax.random.normal(kx, (seq_len, batch, input_size), jnp.float32)
    hidden0 = jnp.zeros((batch, hidden_size), jnp.float32)   # RNN.hidden_init()
    params = init_params(kp, input_size, hidden_size, output_size)

    # Fused pipeline: parallel input proj -> serial recurrence -> parallel output proj.
    out_seq, h_final = rnn_forward_seq(x_seq, hidden0, params)
    jax.block_until_ready((out_seq, h_final))

    # Reference: apply the module forward step by step in pure JAX.
    h_ref = hidden0.astype(jnp.bfloat16)
    outs_ref = []
    for t in range(seq_len):
        o_t, h_ref = _ref_step(x_seq[t], h_ref, params)
        outs_ref.append(o_t)
    out_ref = jnp.stack(outs_ref, axis=0)

    assert jnp.allclose(out_seq, out_ref, atol=2e-2, rtol=2e-2), "seq output mismatch"
    assert jnp.allclose(h_final, h_ref.astype(jnp.float32),
                        atol=2e-2, rtol=2e-2), "final hidden mismatch"

    # Single-step path == exact module forward(x, hidden) -> (output, h).
    out1, h1 = rnn_forward(x_seq[0], hidden0, params)
    out1_ref, h1_ref = _ref_step(x_seq[0], hidden0.astype(jnp.bfloat16), params)
    jax.block_until_ready((out1, h1))
    assert jnp.allclose(out1, out1_ref, atol=2e-2, rtol=2e-2), "step output mismatch"
    assert jnp.allclose(h1, h1_ref.astype(jnp.float32),
                        atol=2e-2, rtol=2e-2), "step hidden mismatch"

    print("KERNEL_OK")
</pallas_src>

<mosaic_0001>
module attributes {stable_mosaic.version = 11 : i64} {
  func.func @_proj_kernel(%arg0: i32, %arg1: memref<64x128xbf16, #tpu.memory_space<vmem>>, %arg2: memref<128x128xbf16, #tpu.memory_space<vmem>>, %arg3: memref<1x128xf32, #tpu.memory_space<vmem>>, %arg4: memref<64x128xf32, #tpu.memory_space<vmem>>) attributes {dimension_semantics = [#tpu.dimension_semantics<parallel>], iteration_bounds = array<i64: 1>, scalar_prefetch = 0 : i64, scratch_operands = 0 : i64, tpu.core_type = #tpu.core_type<tc>, window_params = [{transform_indices = @transform_0, window_bounds = array<i64: 64, 128>}, {pipeline_mode = #tpu.pipeline_mode<synchronous>, transform_indices = @transform_1, window_bounds = array<i64: 128, 128>}, {pipeline_mode = #tpu.pipeline_mode<synchronous>, transform_indices = @transform_2, window_bounds = array<i64: 1, 128>}, {transform_indices = @transform_3, window_bounds = array<i64: 64, 128>}]} {
    %c0 = arith.constant 0 : index
    %c0_0 = arith.constant 0 : index
    %0 = vector.load %arg1[%c0, %c0_0] : memref<64x128xbf16, #tpu.memory_space<vmem>>, vector<64x128xbf16>
    %c0_1 = arith.constant 0 : index
    %c0_2 = arith.constant 0 : index
    %1 = vector.load %arg2[%c0_1, %c0_2] : memref<128x128xbf16, #tpu.memory_space<vmem>>, vector<128x128xbf16>
    %cst = arith.constant dense<0.000000e+00> : vector<64x128xf32>
    %2 = tpu.matmul %0, %1, %cst {dimension_numbers = #tpu.dot_dimension_numbers<[1], [0], [0], [1], [0, 0, 1, 1], [], []>} : vector<64x128xbf16>, vector<128x128xbf16>, vector<64x128xf32> -> vector<64x128xf32>
    %c0_3 = arith.constant 0 : index
    %c0_4 = arith.constant 0 : index
    %3 = vector.load %arg3[%c0_3, %c0_4] : memref<1x128xf32, #tpu.memory_space<vmem>>, vector<1x128xf32>
    %4 = vector.broadcast %3 : vector<1x128xf32> to vector<64x128xf32>
    %5 = arith.addf %2, %4 : vector<64x128xf32>
    %c0_5 = arith.constant 0 : index
    %c0_6 = arith.constant 0 : index
    %6 = vector.load %arg4[%c0_5, %c0_6] : memref<64x128xf32, #tpu.memory_space<vmem>>, vector<64x128xf32>
    tpu.vector_store %arg4[%c0_5, %c0_6], %5 {strides = array<i32>} : memref<64x128xf32, #tpu.memory_space<vmem>>, vector<64x128xf32>,
    return
  }
  func.func @transform_0(%arg0: i32) -> (i32, i32) {
    %c0_i32 = arith.constant 0 : i32
    %c0_i32_0 = arith.constant 0 : i32
    return %arg0, %c0_i32 : i32, i32
  }
  func.func @transform_1(%arg0: i32) -> (i32, i32) {
    %c0_i32 = arith.constant 0 : i32
    %c0_i32_0 = arith.constant 0 : i32
    %c0_i32_1 = arith.constant 0 : i32
    return %c0_i32, %c0_i32_0 : i32, i32
  }
  func.func @transform_2(%arg0: i32) -> (i32, i32) {
    %c0_i32 = arith.constant 0 : i32
    %c0_i32_0 = arith.constant 0 : i32
    %c0_i32_1 = arith.constant 0 : i32
    return %c0_i32, %c0_i32_0 : i32, i32
  }
  func.func @transform_3(%arg0: i32) -> (i32, i32) {
    %c0_i32 = arith.constant 0 : i32
    %c0_i32_0 = arith.constant 0 : i32
    return %arg0, %c0_i32 : i32, i32
  }
}

module attributes {stable_mosaic.version = 11 : i64} {
  func.func @_rnn_recurrence_kernel(%arg0: i32, %arg1: memref<8x8x128xf32, #tpu.memory_space<vmem>>, %arg2: memref<8x128xbf16, #tpu.memory_space<vmem>>, %arg3: memref<128x128xbf16, #tpu.memory_space<vmem>>, %arg4: memref<8x8x128xbf16, #tpu.memory_space<vmem>>, %arg5: memref<8x128xbf16, #tpu.memory_space<vmem>>) attributes {dimension_semantics = [#tpu.dimension_semantics<arbitrary>], iteration_bounds = array<i64: 1>, scalar_prefetch = 0 : i64, scratch_operands = 1 : i64, tpu.core_type = #tpu.core_type<tc>, window_params = [{transform_indices = @transform_0, window_bounds = array<i64: 8, 8, 128>}, {pipeline_mode = #tpu.pipeline_mode<synchronous>, transform_indices = @transform_1, window_bounds = array<i64: 8, 128>}, {pipeline_mode = #tpu.pipeline_mode<synchronous>, transform_indices = @transform_2, window_bounds = array<i64: 128, 128>}, {transform_indices = @transform_3, window_bounds = array<i64: 8, 8, 128>}]} {
    %c0_i32 = arith.constant 0 : i32
    %0 = arith.cmpi eq, %arg0, %c0_i32 : i32
    %1 = arith.extui %0 : i1 to i32
    %c0_i32_0 = arith.constant 0 : i32
    %2 = arith.cmpi ne, %1, %c0_i32_0 : i32
    scf.if %2 {
      %c0_54 = arith.constant 0 : index
      %c0_55 = arith.constant 0 : index
      %110 = vector.load %arg2[%c0_54, %c0_55] : memref<8x128xbf16, #tpu.memory_space<vmem>>, vector<8x128xbf16>
      %c0_56 = arith.constant 0 : index
      %c0_57 = arith.constant 0 : index
      %111 = vector.load %arg5[%c0_56, %c0_57] : memref<8x128xbf16, #tpu.memory_space<vmem>>, vector<8x128xbf16>
      tpu.vector_store %arg5[%c0_56, %c0_57], %110 {strides = array<i32>} : memref<8x128xbf16, #tpu.memory_space<vmem>>, vector<8x128xbf16>,
    } else {
    }
    %c0 = arith.constant 0 : index
    %c0_1 = arith.constant 0 : index
    %3 = vector.load %arg3[%c0, %c0_1] : memref<128x128xbf16, #tpu.memory_space<vmem>>, vector<128x128xbf16>
    %c0_2 = arith.constant 0 : index
    %c0_3 = arith.constant 0 : index
    %4 = vector.load %arg5[%c0_2, %c0_3] : memref<8x128xbf16, #tpu.memory_space<vmem>>, vector<8x128xbf16>
    %c0_i32_4 = arith.constant 0 : i32
    %5 = arith.index_cast %c0_i32_4 : i32 to index
    %c0_5 = arith.constant 0 : index
    %c0_6 = arith.constant 0 : index
    %6 = vector.load %arg1[%5, %c0_5, %c0_6] : memref<8x8x128xf32, #tpu.memory_space<vmem>>, vector<1x8x128xf32>
    %7 = vector.shape_cast %6 : vector<1x8x128xf32> to vector<8x128xf32>
    %cst = arith.constant dense<0.000000e+00> : vector<8x128xf32>
    %8 = tpu.matmul %4, %3, %cst {dimension_numbers = #tpu.dot_dimension_numbers<[1], [0], [0], [1], [0, 0, 1, 1], [], []>} : vector<8x128xbf16>, vector<128x128xbf16>, vector<8x128xf32> -> vector<8x128xf32>
    %9 = arith.addf %7, %8 : vector<8x128xf32>
    %cst_7 = arith.constant 0.000000e+00 : f32
    %10 = vector.broadcast %cst_7 : f32 to vector<8x128xf32>
    %11 = arith.maximumf %9, %10 : vector<8x128xf32>
    %12 = arith.truncf %11 : vector<8x128xf32> to vector<8x128xbf16>
    %13 = arith.index_cast %c0_i32_4 : i32 to index
    %c0_8 = arith.constant 0 : index
    %c0_9 = arith.constant 0 : index
    %14 = vector.load %arg4[%13, %c0_8, %c0_9] : memref<8x8x128xbf16, #tpu.memory_space<vmem>>, vector<1x8x128xbf16>
    %15 = vector.shape_cast %14 : vector<1x8x128xbf16> to vector<8x128xbf16>
    %16 = vector.shape_cast %12 : vector<8x128xbf16> to vector<1x8x128xbf16>
    tpu.vector_store %arg4[%13, %c0_8, %c0_9], %16 {strides = array<i32>} : memref<8x8x128xbf16, #tpu.memory_space<vmem>>, vector<1x8x128xbf16>,
    %17 = arith.truncf %11 : vector<8x128xf32> to vector<8x128xbf16>
    %c1_i32 = arith.constant 1 : i32
    %18 = arith.index_cast %c1_i32 : i32 to index
    %c0_10 = arith.constant 0 : index
    %c0_11 = arith.constant 0 : index
    %19 = vector.load %arg1[%18, %c0_10, %c0_11] : memref<8x8x128xf32, #tpu.memory_space<vmem>>, vector<1x8x128xf32>
    %20 = vector.shape_cast %19 : vector<1x8x128xf32> to vector<8x128xf32>
    %cst_12 = arith.constant dense<0.000000e+00> : vector<8x128xf32>
    %21 = tpu.matmul %17, %3, %cst_12 {dimension_numbers = #tpu.dot_dimension_numbers<[1], [0], [0], [1], [0, 0, 1, 1], [], []>} : vector<8x128xbf16>, vector<128x128xbf16>, vector<8x128xf32> -> vector<8x128xf32>
    %22 = arith.addf %20, %21 : vector<8x128xf32>
    %cst_13 = arith.constant 0.000000e+00 : f32
    %23 = vector.broadcast %cst_13 : f32 to vector<8x128xf32>
    %24 = arith.maximumf %22, %23 : vector<8x128xf32>
    %25 = arith.truncf %24 : vector<8x128xf32> to vector<8x128xbf16>
    %26 = arith.index_cast %c1_i32 : i32 to index
    %c0_14 = arith.constant 0 : index
    %c0_15 = arith.constant 0 : index
    %27 = vector.load %arg4[%26, %c0_14, %c0_15] : memref<8x8x128xbf16, #tpu.memory_space<vmem>>, vector<1x8x128xbf16>
    %28 = vector.shape_cast %27 : vector<1x8x128xbf16> to vector<8x128xbf16>
    %29 = vector.shape_cast %25 : vector<8x128xbf16> to vector<1x8x128xbf16>
    tpu.vector_store %arg4[%26, %c0_14, %c0_15], %29 {strides = array<i32>} : memref<8x8x128xbf16, #tpu.memory_space<vmem>>, vector<1x8x128xbf16>,
    %30 = arith.truncf %24 : vector<8x128xf32> to vector<8x128xbf16>
    %c2_i32 = arith.constant 2 : i32
    %31 = arith.index_cast %c2_i32 : i32 to index
    %c0_16 = arith.constant 0 : index
    %c0_17 = arith.constant 0 : index
    %32 = vector.load %arg1[%31, %c0_16, %c0_17] : memref<8x8x128xf32, #tpu.memory_space<vmem>>, vector<1x8x128xf32>
    %33 = vector.shape_cast %32 : vector<1x8x128xf32> to vector<8x128xf32>
    %cst_18 = arith.constant dense<0.000000e+00> : vector<8x128xf32>
    %34 = tpu.matmul %30, %3, %cst_18 {dimension_numbers = #tpu.dot_dimension_numbers<[1], [0], [0], [1], [0, 0, 1, 1], [], []>} : vector<8x128xbf16>, vector<128x128xbf16>, vector<8x128xf32> -> vector<8x128xf32>
    %35 = arith.addf %33, %34 : vector<8x128xf32>
    %cst_19 = arith.constant 0.000000e+00 : f32
    %36 = vector.broadcast %cst_19 : f32 to vector<8x128xf32>
    %37 = arith.maximumf %35, %36 : vector<8x128xf32>
    %38 = arith.truncf %37 : vector<8x128xf32> to vector<8x128xbf16>
    %39 = arith.index_cast %c2_i32 : i32 to index
    %c0_20 = arith.constant 0 : index
    %c0_21 = arith.constant 0 : index
    %40 = vector.load %arg4[%39, %c0_20, %c0_21] : memref<8x8x128xbf16, #tpu.memory_space<vmem>>, vector<1x8x128xbf16>
    %41 = vector.shape_cast %40 : vector<1x8x128xbf16> to vector<8x128xbf16>
    %42 = vector.shape_cast %38 : vector<8x128xbf16> to vector<1x8x128xbf16>
    tpu.vector_store %arg4[%39, %c0_20, %c0_21], %42 {strides = array<i32>} : memref<8x8x128xbf16, #tpu.memory_space<vmem>>, vector<1x8x128xbf16>,
    %43 = arith.truncf %37 : vector<8x128xf32> to vector<8x128xbf16>
    %c3_i32 = arith.constant 3 : i32
    %44 = arith.index_cast %c3_i32 : i32 to index
    %c0_22 = arith.constant 0 : index
    %c0_23 = arith.constant 0 : index
    %45 = vector.load %arg1[%44, %c0_22, %c0_23] : memref<8x8x128xf32, #tpu.memory_space<vmem>>, vector<1x8x128xf32>
    %46 = vector.shape_cast %45 : vector<1x8x128xf32> to vector<8x128xf32>
    %cst_24 = arith.constant dense<0.000000e+00> : vector<8x128xf32>
    %47 = tpu.matmul %43, %3, %cst_24 {dimension_numbers = #tpu.dot_dimension_numbers<[1], [0], [0], [1], [0, 0, 1, 1], [], []>} : vector<8x128xbf16>, vector<128x128xbf16>, vector<8x128xf32> -> vector<8x128xf32>
    %48 = arith.addf %46, %47 : vector<8x128xf32>
    %cst_25 = arith.constant 0.000000e+00 : f32
    %49 = vector.broadcast %cst_25 : f32 to vector<8x128xf32>
    %50 = arith.maximumf %48, %49 : vector<8x128xf32>
    %51 = arith.truncf %50 : vector<8x128xf32> to vector<8x128xbf16>
    %52 = arith.index_cast %c3_i32 : i32 to index
    %c0_26 = arith.constant 0 : index
    %c0_27 = arith.constant 0 : index
    %53 = vector.load %arg4[%52, %c0_26, %c0_27] : memref<8x8x128xbf16, #tpu.memory_space<vmem>>, vector<1x8x128xbf16>
    %54 = vector.shape_cast %53 : vector<1x8x128xbf16> to vector<8x128xbf16>
    %55 = vector.shape_cast %51 : vector<8x128xbf16> to vector<1x8x128xbf16>
    tpu.vector_store %arg4[%52, %c0_26, %c0_27], %55 {strides = array<i32>} : memref<8x8x128xbf16, #tpu.memory_space<vmem>>, vector<1x8x128xbf16>,
    %56 = arith.truncf %50 : vector<8x128xf32> to vector<8x128xbf16>
    %c4_i32 = arith.constant 4 : i32
    %57 = arith.index_cast %c4_i32 : i32 to index
    %c0_28 = arith.constant 0 : index
    %c0_29 = arith.constant 0 : index
    %58 = vector.load %arg1[%57, %c0_28, %c0_29] : memref<8x8x128xf32, #tpu.memory_space<vmem>>, vector<1x8x128xf32>
    %59 = vector.shape_cast %58 : vector<1x8x128xf32> to vector<8x128xf32>
    %cst_30 = arith.constant dense<0.000000e+00> : vector<8x128xf32>
    %60 = tpu.matmul %56, %3, %cst_30 {dimension_numbers = #tpu.dot_dimension_numbers<[1], [0], [0], [1], [0, 0, 1, 1], [], []>} : vector<8x128xbf16>, vector<128x128xbf16>, vector<8x128xf32> -> vector<8x128xf32>
    %61 = arith.addf %59, %60 : vector<8x128xf32>
    %cst_31 = arith.constant 0.000000e+00 : f32
    %62 = vector.broadcast %cst_31 : f32 to vector<8x128xf32>
    %63 = arith.maximumf %61, %62 : vector<8x128xf32>
    %64 = arith.truncf %63 : vector<8x128xf32> to vector<8x128xbf16>
    %65 = arith.index_cast %c4_i32 : i32 to index
    %c0_32 = arith.constant 0 : index
    %c0_33 = arith.constant 0 : index
    %66 = vector.load %arg4[%65, %c0_32, %c0_33] : memref<8x8x128xbf16, #tpu.memory_space<vmem>>, vector<1x8x128xbf16>
    %67 = vector.shape_cast %66 : vector<1x8x128xbf16> to vector<8x128xbf16>
    %68 = vector.shape_cast %64 : vector<8x128xbf16> to vector<1x8x128xbf16>
    tpu.vector_store %arg4[%65, %c0_32, %c0_33], %68 {strides = array<i32>} : memref<8x8x128xbf16, #tpu.memory_space<vmem>>, vector<1x8x128xbf16>,
    %69 = arith.truncf %63 : vector<8x128xf32> to vector<8x128xbf16>
    %c5_i32 = arith.constant 5 : i32
    %70 = arith.index_cast %c5_i32 : i32 to index
    %c0_34 = arith.constant 0 : index
    %c0_35 = arith.constant 0 : index
    %71 = vector.load %arg1[%70, %c0_34, %c0_35] : memref<8x8x128xf32, #tpu.memory_space<vmem>>, vector<1x8x128xf32>
    %72 = vector.shape_cast %71 : vector<1x8x128xf32> to vector<8x128xf32>
    %cst_36 = arith.constant dense<0.000000e+00> : vector<8x128xf32>
    %73 = tpu.matmul %69, %3, %cst_36 {dimension_numbers = #tpu.dot_dimension_numbers<[1], [0], [0], [1], [0, 0, 1, 1], [], []>} : vector<8x128xbf16>, vector<128x128xbf16>, vector<8x128xf32> -> vector<8x128xf32>
    %74 = arith.addf %72, %73 : vector<8x128xf32>
    %cst_37 = arith.constant 0.000000e+00 : f32
    %75 = vector.broadcast %cst_37 : f32 to vector<8x128xf32>
    %76 = arith.maximumf %74, %75 : vector<8x128xf32>
    %77 = arith.truncf %76 : vector<8x128xf32> to vector<8x128xbf16>
    %78 = arith.index_cast %c5_i32 : i32 to index
    %c0_38 = arith.constant 0 : index
    %c0_39 = arith.constant 0 : index
    %79 = vector.load %arg4[%78, %c0_38, %c0_39] : memref<8x8x128xbf16, #tpu.memory_space<vmem>>, vector<1x8x128xbf16>
    %80 = vector.shape_cast %79 : vector<1x8x128xbf16> to vector<8x128xbf16>
    %81 = vector.shape_cast %77 : vector<8x128xbf16> to vector<1x8x128xbf16>
    tpu.vector_store %arg4[%78, %c0_38, %c0_39], %81 {strides = array<i32>} : memref<8x8x128xbf16, #tpu.memory_space<vmem>>, vector<1x8x128xbf16>,
    %82 = arith.truncf %76 : vector<8x128xf32> to vector<8x128xbf16>
    %c6_i32 = arith.constant 6 : i32
    %83 = arith.index_cast %c6_i32 : i32 to index
    %c0_40 = arith.constant 0 : index
    %c0_41 = arith.constant 0 : index
    %84 = vector.load %arg1[%83, %c0_40, %c0_41] : memref<8x8x128xf32, #tpu.memory_space<vmem>>, vector<1x8x128xf32>
    %85 = vector.shape_cast %84 : vector<1x8x128xf32> to vector<8x128xf32>
    %cst_42 = arith.constant dense<0.000000e+00> : vector<8x128xf32>
    %86 = tpu.matmul %82, %3, %cst_42 {dimension_numbers = #tpu.dot_dimension_numbers<[1], [0], [0], [1], [0, 0, 1, 1], [], []>} : vector<8x128xbf16>, vector<128x128xbf16>, vector<8x128xf32> -> vector<8x128xf32>
    %87 = arith.addf %85, %86 : vector<8x128xf32>
    %cst_43 = arith.constant 0.000000e+00 : f32
    %88 = vector.broadcast %cst_43 : f32 to vector<8x128xf32>
    %89 = arith.maximumf %87, %88 : vector<8x128xf32>
    %90 = arith.truncf %89 : vector<8x128xf32> to vector<8x128xbf16>
    %91 = arith.index_cast %c6_i32 : i32 to index
    %c0_44 = arith.constant 0 : index
    %c0_45 = arith.constant 0 : index
    %92 = vector.load %arg4[%91, %c0_44, %c0_45] : memref<8x8x128xbf16, #tpu.memory_space<vmem>>, vector<1x8x128xbf16>
    %93 = vector.shape_cast %92 : vector<1x8x128xbf16> to vector<8x128xbf16>
    %94 = vector.shape_cast %90 : vector<8x128xbf16> to vector<1x8x128xbf16>
    tpu.vector_store %arg4[%91, %c0_44, %c0_45], %94 {strides = array<i32>} : memref<8x8x128xbf16, #tpu.memory_space<vmem>>, vector<1x8x128xbf16>,
    %95 = arith.truncf %89 : vector<8x128xf32> to vector<8x128xbf16>
    %c7_i32 = arith.constant 7 : i32
    %96 = arith.index_cast %c7_i32 : i32 to index
    %c0_46 = arith.constant 0 : index
    %c0_47 = arith.constant 0 : index
    %97 = vector.load %arg1[%96, %c0_46, %c0_47] : memref<8x8x128xf32, #tpu.memory_space<vmem>>, vector<1x8x128xf32>
    %98 = vector.shape_cast %97 : vector<1x8x128xf32> to vector<8x128xf32>
    %cst_48 = arith.constant dense<0.000000e+00> : vector<8x128xf32>
    %99 = tpu.matmul %95, %3, %cst_48 {dimension_numbers = #tpu.dot_dimension_numbers<[1], [0], [0], [1], [0, 0, 1, 1], [], []>} : vector<8x128xbf16>, vector<128x128xbf16>, vector<8x128xf32> -> vector<8x128xf32>
    %100 = arith.addf %98, %99 : vector<8x128xf32>
    %cst_49 = arith.constant 0.000000e+00 : f32
    %101 = vector.broadcast %cst_49 : f32 to vector<8x128xf32>
    %102 = arith.maximumf %100, %101 : vector<8x128xf32>
    %103 = arith.truncf %102 : vector<8x128xf32> to vector<8x128xbf16>
    %104 = arith.index_cast %c7_i32 : i32 to index
    %c0_50 = arith.constant 0 : index
    %c0_51 = arith.constant 0 : index
    %105 = vector.load %arg4[%104, %c0_50, %c0_51] : memref<8x8x128xbf16, #tpu.memory_space<vmem>>, vector<1x8x128xbf16>
    %106 = vector.shape_cast %105 : vector<1x8x128xbf16> to vector<8x128xbf16>
    %107 = vector.shape_cast %103 : vector<8x128xbf16> to vector<1x8x128xbf16>
    tpu.vector_store %arg4[%104, %c0_50, %c0_51], %107 {strides = array<i32>} : memref<8x8x128xbf16, #tpu.memory_space<vmem>>, vector<1x8x128xbf16>,
    %108 = arith.truncf %102 : vector<8x128xf32> to vector<8x128xbf16>
    %c8_i32 = arith.constant 8 : i32
    %c0_52 = arith.constant 0 : index
    %c0_53 = arith.constant 0 : index
    %109 = vector.load %arg5[%c0_52, %c0_53] : memref<8x128xbf16, #tpu.memory_space<vmem>>, vector<8x128xbf16>
    tpu.vector_store %arg5[%c0_52, %c0_53], %108 {strides = array<i32>} : memref<8x128xbf16, #tpu.memory_space<vmem>>, vector<8x128xbf16>,
    return
  }
  func.func @transform_0(%arg0: i32) -> (i32, i32, i32) {
    %c0_i32 = arith.constant 0 : i32
    %c0_i32_0 = arith.constant 0 : i32
    %c0_i32_1 = arith.constant 0 : i32
    return %arg0, %c0_i32, %c0_i32_0 : i32, i32, i32
  }
  func.func @transform_1(%arg0: i32) -> (i32, i32) {
    %c0_i32 = arith.constant 0 : i32
    %c0_i32_0 = arith.constant 0 : i32
    %c0_i32_1 = arith.constant 0 : i32
    return %c0_i32, %c0_i32_0 : i32, i32
  }
  func.func @transform_2(%arg0: i32) -> (i32, i32) {
    %c0_i32 = arith.constant 0 : i32
    %c0_i32_0 = arith.constant 0 : i32
    %c0_i32_1 = arith.constant 0 : i32
    return %c0_i32, %c0_i32_0 : i32, i32
  }
  func.func @transform_3(%arg0: i32) -> (i32, i32, i32) {
    %c0_i32 = arith.constant 0 : i32
    %c0_i32_0 = arith.constant 0 : i32
    %c0_i32_1 = arith.constant 0 : i32
    return %arg0, %c0_i32, %c0_i32_0 : i32, i32, i32
  }
}

</mosaic_0001>

<llo_original>
// kernel: rnn_forward_seq.3
$region0: #{rnn_forward_seq.3}
  #allocation0 [shape = 'u32[]', space=smem, size = 0x4, offset = 0x4, fixed_abs, tag = 'smem constant byte address 0x4 - core index']
  #allocation1 [shape = 'u32[144,128]{1,0:T(1,128)}', space=vmem, size = 0x12000, scoped, tag = 'internal scratch']
  %s0 = inlined_call_operand.vmem [shape: bf16[64,128], index: 0, kind: input, shape index: {}]
  %s1 = inlined_call_operand.vmem [shape: bf16[128,128], index: 1, kind: input, shape index: {}]
  %s2 = inlined_call_operand.vmem [shape: f32[1,128], index: 2, kind: input, shape index: {}]
  %s3 = inlined_call_operand.vmem [shape: f32[64,128], index: 3, kind: output, shape index: {}]
  %s4 = sld [smem:[#allocation0]]
  $region22: #{rnn_forward_seq.3} parent=0
    _
  %s6 = ssub.s32 1, %s4
  %s7 = scalar_select 0, %s6, %s4
  // Predicated region
  $region2: #{rnn_forward_seq.3} parent=0 // pred_check
    _
  $region3: #{rnn_forward_seq.3} parent=0 // pred_check_branch
    %9 = sbr.rel (0) target = $region5
  $region4: #{rnn_forward_seq.3} parent=0 // pred_region
    _
  $region5: #{rnn_forward_seq.3} parent=0 // pred_fallthru
    _
  // Predicated region
  $region6: #{rnn_forward_seq.3} parent=0 // pred_check
    _
  $region7: #{rnn_forward_seq.3} parent=0 // pred_check_branch
    %11 = sbr.rel (0) target = $region9
  $region8: #{rnn_forward_seq.3} parent=0 // pred_region
    _
  $region9: #{rnn_forward_seq.3} parent=0 // pred_fallthru
    _
  // Predicated region
  $region10: #{rnn_forward_seq.3} parent=0 // pred_check
    _
  $region11: #{rnn_forward_seq.3} parent=0 // pred_check_branch
    %13 = sbr.rel (0) target = $region13
  $region12: #{rnn_forward_seq.3} parent=0 // pred_region
    _
  $region13: #{rnn_forward_seq.3} parent=0 // pred_fallthru
    _
  %v15 = vld [vmem:[%s0] sm:$0xf]
  %v16 = vld [vmem:[%s0 + $0x4] sm:$0xf]
  %v17 = vld [vmem:[%s0 + $0x8] sm:$0xf]
  %v18 = vld [vmem:[%s0 + $0xc] sm:$0xf]
  %v19 = vld [vmem:[%s0 + $0x10] sm:$0xf]
  %v20 = vld [vmem:[%s0 + $0x14] sm:$0xf]
  %v21 = vld [vmem:[%s0 + $0x18] sm:$0xf]
  %v22 = vld [vmem:[%s0 + $0x1c] sm:$0xf]
  %v23 = vld [vmem:[%s1] sm:$0xf]
  %v24 = vld [vmem:[%s1 + $0x4] sm:$0xf]
  %v25 = vld [vmem:[%s1 + $0x8] sm:$0xf]
  %v26 = vld [vmem:[%s1 + $0xc] sm:$0xf]
  %v27 = vld [vmem:[%s1 + $0x10] sm:$0xf]
  %v28 = vld [vmem:[%s1 + $0x14] sm:$0xf]
  %v29 = vld [vmem:[%s1 + $0x18] sm:$0xf]
  %v30 = vld [vmem:[%s1 + $0x1c] sm:$0xf]
  %v31 = vld [vmem:[%s1 + $0x20] sm:$0xf]
  %v32 = vld [vmem:[%s1 + $0x24] sm:$0xf]
  %v33 = vld [vmem:[%s1 + $0x28] sm:$0xf]
  %v34 = vld [vmem:[%s1 + $0x2c] sm:$0xf]
  %v35 = vld [vmem:[%s1 + $0x30] sm:$0xf]
  %v36 = vld [vmem:[%s1 + $0x34] sm:$0xf]
  %v37 = vld [vmem:[%s1 + $0x38] sm:$0xf]
  %v38 = vld [vmem:[%s1 + $0x3c] sm:$0xf]
  %v39 = vld [vmem:[%s2] sm:$0x1]
  %v41 = vlaneseq
  %v42 = vshrl.u32 %v41, 7
  %v43 = vsub.s32 0, %v42
  %v44 = vrot.slane %v39, %v43
  %v54 = vunpack.c.l.b16 %v15
  %v55 = vunpack.c.l.b16 %v16
  %v56 = vunpack.c.l.b16 %v17
  %v57 = vunpack.c.l.b16 %v18
  %v58 = vunpack.c.l.b16 %v19
  %v59 = vunpack.c.l.b16 %v20
  %v60 = vunpack.c.l.b16 %v21
  %v61 = vunpack.c.l.b16 %v22
  %v62 = vpack.c.b16 %v55, %v54
  %v63 = vpack.c.b16 %v57, %v56
  %v64 = vpack.c.b16 %v59, %v58
  %v65 = vpack.c.b16 %v61, %v60
  %v86 = vunpack.c.l.b16 %v23
  %v87 = vunpack.c.l.b16 %v24
  %v88 = vunpack.c.l.b16 %v25
  %v89 = vunpack.c.l.b16 %v26
  %v90 = vunpack.c.l.b16 %v27
  %v91 = vunpack.c.l.b16 %v28
  %v92 = vunpack.c.l.b16 %v29
  %v93 = vunpack.c.l.b16 %v30
  %v94 = vunpack.c.l.b16 %v31
  %v95 = vunpack.c.l.b16 %v32
  %v96 = vunpack.c.l.b16 %v33
  %v97 = vunpack.c.l.b16 %v34
  %v98 = vunpack.c.l.b16 %v35
  %v99 = vunpack.c.l.b16 %v36
  %v100 = vunpack.c.l.b16 %v37
  %v101 = vunpack.c.l.b16 %v38
  %v102 = vpack.c.b16 %v87, %v86
  %v103 = vpack.c.b16 %v89, %v88
  %v104 = vpack.c.b16 %v91, %v90
  %v105 = vpack.c.b16 %v93, %v92
  %v106 = vpack.c.b16 %v95, %v94
  %v107 = vpack.c.b16 %v97, %v96
  %v108 = vpack.c.b16 %v99, %v98
  %v109 = vpack.c.b16 %v101, %v100
  %118 = vmatprep.subr.bf16.mxu0 0
  %119 = vmatpush1.bf16.msra.mxu0 %v102
  %120 = vmatprep.subr.bf16.mxu0 0
  %121 = vmatpush1.bf16.msra.mxu0 %v103
  %122 = vmatprep.subr.bf16.mxu0 0
  %123 = vmatpush1.bf16.msra.mxu0 %v104
  %124 = vmatprep.subr.bf16.mxu0 0
  %125 = vmatpush1.bf16.msra.mxu0 %v105
  %126 = vmatprep.subr.bf16.mxu0 0
  %127 = vmatpush1.bf16.msra.mxu0 %v106
  %128 = vmatprep.subr.bf16.mxu0 0
  %129 = vmatpush1.bf16.msra.mxu0 %v107
  %130 = vmatprep.subr.bf16.mxu0 0
  %131 = vmatpush1.bf16.msra.mxu0 %v108
  %132 = vmatprep.subr.bf16.mxu0 0
  %133 = vmatpush1.bf16.msra.mxu0 %v109
  %134 = vmatprep.subr.bf16.mxu0 0
  %135 = vmatpush1.bf16.msra.mxu0 0
  %136 = vmatprep.subr.bf16.mxu0 0
  %137 = vmatpush1.bf16.msra.mxu0 0
  %138 = vmatprep.subr.bf16.mxu0 0
  %139 = vmatpush1.bf16.msra.mxu0 0
  %140 = vmatprep.subr.bf16.mxu0 0
  %141 = vmatpush1.bf16.msra.mxu0 0
  %142 = vmatprep.subr.bf16.mxu0 0
  %143 = vmatpush1.bf16.msra.mxu0 0
  %144 = vmatprep.subr.bf16.mxu0 0
  %145 = vmatpush1.bf16.msra.mxu0 0
  %146 = vmatprep.subr.bf16.mxu0 0
  %147 = vmatpush1.bf16.msra.mxu0 0
  %148 = vmatprep.subr.bf16.mxu0 0
  %149 = vmatpush1.bf16.msra.mxu0 0
  %150 = vmatprep.mubr.bf16.mxu0 0
  %151 = vmatmul.mubr.bf16.gmra.mrb[0].mxu0 %v62
  %v152 = vpop.f32.mrb[0].mxu0
  %v153 = vadd.f32 %v44, %v152
  %v154 = vpop.f32.mrb[0].mxu0
  %v155 = vpop.f32.mrb[0].mxu0
  %v156 = vadd.f32 %v44, %v155
  %v157 = vpop.f32.mrb[0].mxu0
  %158 = vmatprep.mubr.bf16.mxu0 0
  %159 = vmatmul.mubr.bf16.gmra.mrb[0].mxu0 %v63
  %v160 = vpop.f32.mrb[0].mxu0
  %v161 = vadd.f32 %v44, %v160
  %v162 = vpop.f32.mrb[0].mxu0
  %v163 = vpop.f32.mrb[0].mxu0
  %v164 = vadd.f32 %v44, %v163
  %v165 = vpop.f32.mrb[0].mxu0
  %166 = vmatprep.mubr.bf16.mxu0 0
  %167 = vmatmul.mubr.bf16.gmra.mrb[0].mxu0 %v64
  %v168 = vpop.f32.mrb[0].mxu0
  %v169 = vadd.f32 %v44, %v168
  %v170 = vpop.f32.mrb[0].mxu0
  %v171 = vpop.f32.mrb[0].mxu0
  %v172 = vadd.f32 %v44, %v171
  %v173 = vpop.f32.mrb[0].mxu0
  %174 = vmatprep.mubr.bf16.mxu0 0
  %175 = vmatmul.mubr.bf16.gmra.mrb[0].mxu0 %v65
  %v176 = vpop.f32.mrb[0].mxu0
  %v177 = vadd.f32 %v44, %v176
  %v178 = vpop.f32.mrb[0].mxu0
  %v179 = vpop.f32.mrb[0].mxu0
  %v180 = vadd.f32 %v44, %v179
  %v181 = vpop.f32.mrb[0].mxu0
  %182 = vdwg.mxu0
  %183 = vst [vmem:[%s3] sm:$0xff] %v153
  %184 = vst [vmem:[%s3 + $0x8] sm:$0xff] %v156
  %185 = vst [vmem:[%s3 + $0x10] sm:$0xff] %v161
  %186 = vst [vmem:[%s3 + $0x18] sm:$0xff] %v164
  %187 = vst [vmem:[%s3 + $0x20] sm:$0xff] %v169
  %188 = vst [vmem:[%s3 + $0x28] sm:$0xff] %v172
  %189 = vst [vmem:[%s3 + $0x30] sm:$0xff] %v177
  %190 = vst [vmem:[%s3 + $0x38] sm:$0xff] %v180
  // Predicated region
  $region14: #{rnn_forward_seq.3} parent=0 // pred_check
    _
  $region15: #{rnn_forward_seq.3} parent=0 // pred_check_branch
    %192 = sbr.rel (0) target = $region17
  $region16: #{rnn_forward_seq.3} parent=0 // pred_region
    _
  $region17: #{rnn_forward_seq.3} parent=0 // pred_fallthru
    _
  // Predicated region
  $region18: #{rnn_forward_seq.3} parent=0 // pred_check
    _
  $region19: #{rnn_forward_seq.3} parent=0 // pred_check_branch
    %194 = sbr.rel (0) target = $region21
  $region20: #{rnn_forward_seq.3} parent=0 // pred_region
    _
  $region21: #{rnn_forward_seq.3} parent=0 // pred_fallthru
    _

// kernel: rnn_forward_seq.4
$region0: #{rnn_forward_seq.4}
  #allocation0 [shape = 'u32[]', space=smem, size = 0x4, offset = 0x4, fixed_abs, tag = 'smem constant byte address 0x4 - core index']
  #allocation1 [shape = 'u32[144,128]{1,0:T(1,128)}', space=vmem, size = 0x12000, scoped, tag = 'internal scratch']
  #allocation2 [shape = 'bf16[8,128]{1,0:T(8,128)(2,1)}', space=vmem, size = 0x800, scoped, tag = 'scratch operand']
  %s0 = inlined_call_operand.vmem [shape: f32[8,8,128], index: 0, kind: input, shape index: {}]
  %s1 = inlined_call_operand.vmem [shape: bf16[8,128], index: 1, kind: input, shape index: {}]
  %s2 = inlined_call_operand.vmem [shape: bf16[128,128], index: 2, kind: input, shape index: {}]
  %s3 = inlined_call_operand.vmem [shape: bf16[8,8,128], index: 3, kind: output, shape index: {}]
  %s4 = sld [smem:[#allocation0]]
  $region26: #{rnn_forward_seq.4} parent=0
    _
  %s6 = ssub.s32 1, %s4
  %s7 = scalar_select 0, %s6, %s4
  // Predicated region
  $region2: #{rnn_forward_seq.4} parent=0 // pred_check
    _
  $region3: #{rnn_forward_seq.4} parent=0 // pred_check_branch
    %9 = sbr.rel (0) target = $region5
  $region4: #{rnn_forward_seq.4} parent=0 // pred_region
    _
  $region5: #{rnn_forward_seq.4} parent=0 // pred_fallthru
    _
  // Predicated region
  $region6: #{rnn_forward_seq.4} parent=0 // pred_check
    _
  $region7: #{rnn_forward_seq.4} parent=0 // pred_check_branch
    %11 = sbr.rel (0) target = $region9
  $region8: #{rnn_forward_seq.4} parent=0 // pred_region
    _
  $region9: #{rnn_forward_seq.4} parent=0 // pred_fallthru
    _
  // Predicated region
  $region10: #{rnn_forward_seq.4} parent=0 // pred_check
    _
  $region11: #{rnn_forward_seq.4} parent=0 // pred_check_branch
    %13 = sbr.rel (0) target = $region13
  $region12: #{rnn_forward_seq.4} parent=0 // pred_region
    _
  $region13: #{rnn_forward_seq.4} parent=0 // pred_fallthru
    _
  %p15 = scmp.eq.s32.totalorder 0, 0
  // Predicated region
  $region14: #{rnn_forward_seq.4} parent=0 // pred_check
    %p16 = pneg %p15
  $region15: #{rnn_forward_seq.4} parent=0 // pred_check_branch
    %18 = sbr.rel (%p16) target = $region17
  $region16: #{rnn_forward_seq.4} parent=0 // pred_region
    %v19 = vld [vmem:[%s1] sm:$0xf]
    %20 = vst [vmem:[#allocation2] sm:$0xf] %v19
  $region17: #{rnn_forward_seq.4} parent=0 // pred_fallthru
    _
  %v21 = vld [vmem:[%s2] sm:$0xf]
  %v22 = vld [vmem:[%s2 + $0x4] sm:$0xf]
  %v23 = vld [vmem:[%s2 + $0x8] sm:$0xf]
  %v24 = vld [vmem:[%s2 + $0xc] sm:$0xf]
  %v25 = vld [vmem:[%s2 + $0x10] sm:$0xf]
  %v26 = vld [vmem:[%s2 + $0x14] sm:$0xf]
  %v27 = vld [vmem:[%s2 + $0x18] sm:$0xf]
  %v28 = vld [vmem:[%s2 + $0x1c] sm:$0xf]
  %v29 = vld [vmem:[%s2 + $0x20] sm:$0xf]
  %v30 = vld [vmem:[%s2 + $0x24] sm:$0xf]
  %v31 = vld [vmem:[%s2 + $0x28] sm:$0xf]
  %v32 = vld [vmem:[%s2 + $0x2c] sm:$0xf]
  %v33 = vld [vmem:[%s2 + $0x30] sm:$0xf]
  %v34 = vld [vmem:[%s2 + $0x34] sm:$0xf]
  %v35 = vld [vmem:[%s2 + $0x38] sm:$0xf]
  %v36 = vld [vmem:[%s2 + $0x3c] sm:$0xf]
  %v37 = vld [vmem:[#allocation2] sm:$0xf]
  %v38 = vld [vmem:[%s0] sm:$0xff]
  %v55 = vunpack.c.l.b16 %v21
  %v56 = vunpack.c.l.b16 %v22
  %v57 = vunpack.c.l.b16 %v23
  %v58 = vunpack.c.l.b16 %v24
  %v59 = vunpack.c.l.b16 %v25
  %v60 = vunpack.c.l.b16 %v26
  %v61 = vunpack.c.l.b16 %v27
  %v62 = vunpack.c.l.b16 %v28
  %v63 = vunpack.c.l.b16 %v29
  %v64 = vunpack.c.l.b16 %v30
  %v65 = vunpack.c.l.b16 %v31
  %v66 = vunpack.c.l.b16 %v32
  %v67 = vunpack.c.l.b16 %v33
  %v68 = vunpack.c.l.b16 %v34
  %v69 = vunpack.c.l.b16 %v35
  %v70 = vunpack.c.l.b16 %v36
  %v71 = vpack.c.b16 %v56, %v55
  %v72 = vpack.c.b16 %v58, %v57
  %v73 = vpack.c.b16 %v60, %v59
  %v74 = vpack.c.b16 %v62, %v61
  %v75 = vpack.c.b16 %v64, %v63
  %v76 = vpack.c.b16 %v66, %v65
  %v77 = vpack.c.b16 %v68, %v67
  %v78 = vpack.c.b16 %v70, %v69
  %87 = vmatprep.subr.bf16.mxu0 0
  %88 = vmatpush1.bf16.msra.mxu0 %v71
  %89 = vmatprep.subr.bf16.mxu0 0
  %90 = vmatpush1.bf16.msra.mxu0 %v72
  %91 = vmatprep.subr.bf16.mxu0 0
  %92 = vmatpush1.bf16.msra.mxu0 %v73
  %93 = vmatprep.subr.bf16.mxu0 0
  %94 = vmatpush1.bf16.msra.mxu0 %v74
  %95 = vmatprep.subr.bf16.mxu0 0
  %96 = vmatpush1.bf16.msra.mxu0 %v75
  %97 = vmatprep.subr.bf16.mxu0 0
  %98 = vmatpush1.bf16.msra.mxu0 %v76
  %99 = vmatprep.subr.bf16.mxu0 0
  %100 = vmatpush1.bf16.msra.mxu0 %v77
  %101 = vmatprep.subr.bf16.mxu0 0
  %102 = vmatpush1.bf16.msra.mxu0 %v78
  %103 = vmatprep.subr.bf16.mxu0 0
  %104 = vmatpush1.bf16.msra.mxu0 0
  %105 = vmatprep.subr.bf16.mxu0 0
  %106 = vmatpush1.bf16.msra.mxu0 0
  %107 = vmatprep.subr.bf16.mxu0 0
  %108 = vmatpush1.bf16.msra.mxu0 0
  %109 = vmatprep.subr.bf16.mxu0 0
  %110 = vmatpush1.bf16.msra.mxu0 0
  %111 = vmatprep.subr.bf16.mxu0 0
  %112 = vmatpush1.bf16.msra.mxu0 0
  %113 = vmatprep.subr.bf16.mxu0 0
  %114 = vmatpush1.bf16.msra.mxu0 0
  %115 = vmatprep.subr.bf16.mxu0 0
  %116 = vmatpush1.bf16.msra.mxu0 0
  %117 = vmatprep.subr.bf16.mxu0 0
  %118 = vmatpush1.bf16.msra.mxu0 0
  %119 = vmatprep.mubr.bf16.mxu0 0
  %120 = vmatmul.mubr.bf16.gmra.mrb[0].mxu0 %v37
  %v121 = vpop.f32.mrb[0].mxu0
  %v122 = vadd.f32 0.0, %v121
  %v123 = vpop.f32.mrb[0].mxu0
  %v124 = vpop.f32.mrb[0].mxu0
  %v125 = vpop.f32.mrb[0].mxu0
  %126 = vdwg.mxu0
  %v127 = vadd.f32 %v38, %v122
  %v128 = vmax.f32 %v127, 0.0
  %v129 = vpack.c.bf16 %v128, %v128
  %130 = vst [vmem:[%s3] sm:$0xf] %v129
  %s131 = scalar_lea.vmem %s0, 8
  %v132 = vld [vmem:[%s131] sm:$0xff]
  %133 = vmatprep.subr.bf16.mxu0 0
  %134 = vmatpush1.bf16.msra.mxu0 %v71
  %135 = vmatprep.subr.bf16.mxu0 0
  %136 = vmatpush1.bf16.msra.mxu0 %v72
  %137 = vmatprep.subr.bf16.mxu0 0
  %138 = vmatpush1.bf16.msra.mxu0 %v73
  %139 = vmatprep.subr.bf16.mxu0 0
  %140 = vmatpush1.bf16.msra.mxu0 %v74
  %141 = vmatprep.subr.bf16.mxu0 0
  %142 = vmatpush1.bf16.msra.mxu0 %v75
  %143 = vmatprep.subr.bf16.mxu0 0
  %144 = vmatpush1.bf16.msra.mxu0 %v76
  %145 = vmatprep.subr.bf16.mxu0 0
  %146 = vmatpush1.bf16.msra.mxu0 %v77
  %147 = vmatprep.subr.bf16.mxu0 0
  %148 = vmatpush1.bf16.msra.mxu0 %v78
  %149 = vmatprep.subr.bf16.mxu0 0
  %150 = vmatpush1.bf16.msra.mxu0 0
  %151 = vmatprep.subr.bf16.mxu0 0
  %152 = vmatpush1.bf16.msra.mxu0 0
  %153 = vmatprep.subr.bf16.mxu0 0
  %154 = vmatpush1.bf16.msra.mxu0 0
  %155 = vmatprep.subr.bf16.mxu0 0
  %156 = vmatpush1.bf16.msra.mxu0 0
  %157 = vmatprep.subr.bf16.mxu0 0
  %158 = vmatpush1.bf16.msra.mxu0 0
  %159 = vmatprep.subr.bf16.mxu0 0
  %160 = vmatpush1.bf16.msra.mxu0 0
  %161 = vmatprep.subr.bf16.mxu0 0
  %162 = vmatpush1.bf16.msra.mxu0 0
  %163 = vmatprep.subr.bf16.mxu0 0
  %164 = vmatpush1.bf16.msra.mxu0 0
  %165 = vmatprep.mubr.bf16.mxu0 0
  %166 = vmatmul.mubr.bf16.gmra.mrb[0].mxu0 %v129
  %v167 = vpop.f32.mrb[0].mxu0
  %v168 = vadd.f32 0.0, %v167
  %v169 = vpop.f32.mrb[0].mxu0
  %v170 = vpop.f32.mrb[0].mxu0
  %v171 = vpop.f32.mrb[0].mxu0
  %172 = vdwg.mxu0
  %v173 = vadd.f32 %v132, %v168
  %v174 = vmax.f32 %v173, 0.0
  %v175 = vpack.c.bf16 %v174, %v174
  %s176 = scalar_lea.vmem %s3, 4
  %177 = vst [vmem:[%s176] sm:$0xf] %v175
  %s178 = scalar_lea.vmem %s0, 16
  %v179 = vld [vmem:[%s178] sm:$0xff]
  %180 = vmatprep.subr.bf16.mxu0 0
  %181 = vmatpush1.bf16.msra.mxu0 %v71
  %182 = vmatprep.subr.bf16.mxu0 0
  %183 = vmatpush1.bf16.msra.mxu0 %v72
  %184 = vmatprep.subr.bf16.mxu0 0
  %185 = vmatpush1.bf16.msra.mxu0 %v73
  %186 = vmatprep.subr.bf16.mxu0 0
  %187 = vmatpush1.bf16.msra.mxu0 %v74
  %188 = vmatprep.subr.bf16.mxu0 0
  %189 = vmatpush1.bf16.msra.mxu0 %v75
  %190 = vmatprep.subr.bf16.mxu0 0
  %191 = vmatpush1.bf16.msra.mxu0 %v76
  %192 = vmatprep.subr.bf16.mxu0 0
  %193 = vmatpush1.bf16.msra.mxu0 %v77
  %194 = vmatprep.subr.bf16.mxu0 0
  %195 = vmatpush1.bf16.msra.mxu0 %v78
  %196 = vmatprep.subr.bf16.mxu0 0
  %197 = vmatpush1.bf16.msra.mxu0 0
  %198 = vmatprep.subr.bf16.mxu0 0
  %199 = vmatpush1.bf16.msra.mxu0 0
  %200 = vmatprep.subr.bf16.mxu0 0
  %201 = vmatpush1.bf16.msra.mxu0 0
  %202 = vmatprep.subr.bf16.mxu0 0
  %203 = vmatpush1.bf16.msra.mxu0 0
  %204 = vmatprep.subr.bf16.mxu0 0
  %205 = vmatpush1.bf16.msra.mxu0 0
  %206 = vmatprep.subr.bf16.mxu0 0
  %207 = vmatpush1.bf16.msra.mxu0 0
  %208 = vmatprep.subr.bf16.mxu0 0
  %209 = vmatpush1.bf16.msra.mxu0 0
  %210 = vmatprep.subr.bf16.mxu0 0
  %211 = vmatpush1.bf16.msra.mxu0 0
  %212 = vmatprep.mubr.bf16.mxu0 0
  %213 = vmatmul.mubr.bf16.gmra.mrb[0].mxu0 %v175
  %v214 = vpop.f32.mrb[0].mxu0
  %v215 = vadd.f32 0.0, %v214
  %v216 = vpop.f32.mrb[0].mxu0
  %v217 = vpop.f32.mrb[0].mxu0
  %v218 = vpop.f32.mrb[0].mxu0
  %219 = vdwg.mxu0
  %v220 = vadd.f32 %v179, %v215
  %v221 = vmax.f32 %v220, 0.0
  %v222 = vpack.c.bf16 %v221, %v221
  %s223 = scalar_lea.vmem %s3, 8
  %224 = vst [vmem:[%s223] sm:$0xf] %v222
  %s225 = scalar_lea.vmem %s0, 24
  %v226 = vld [vmem:[%s225] sm:$0xff]
  %227 = vmatprep.subr.bf16.mxu0 0
  %228 = vmatpush1.bf16.msra.mxu0 %v71
  %229 = vmatprep.subr.bf16.mxu0 0
  %230 = vmatpush1.bf16.msra.mxu0 %v72
  %231 = vmatprep.subr.bf16.mxu0 0
  %232 = vmatpush1.bf16.msra.mxu0 %v73
  %233 = vmatprep.subr.bf16.mxu0 0
  %234 = vmatpush1.bf16.msra.mxu0 %v74
  %235 = vmatprep.subr.bf16.mxu0 0
  %236 = vmatpush1.bf16.msra.mxu0 %v75
  %237 = vmatprep.subr.bf16.mxu0 0
  %238 = vmatpush1.bf16.msra.mxu0 %v76
  %239 = vmatprep.subr.bf16.mxu0 0
  %240 = vmatpush1.bf16.msra.mxu0 %v77
  %241 = vmatprep.subr.bf16.mxu0 0
  %242 = vmatpush1.bf16.msra.mxu0 %v78
  %243 = vmatprep.subr.bf16.mxu0 0
  %244 = vmatpush1.bf16.msra.mxu0 0
  %245 = vmatprep.subr.bf16.mxu0 0
  %246 = vmatpush1.bf16.msra.mxu0 0
  %247 = vmatprep.subr.bf16.mxu0 0
  %248 = vmatpush1.bf16.msra.mxu0 0
  %249 = vmatprep.subr.bf16.mxu0 0
  %250 = vmatpush1.bf16.msra.mxu0 0
  %251 = vmatprep.subr.bf16.mxu0 0
  %252 = vmatpush1.bf16.msra.mxu0 0
  %253 = vmatprep.subr.bf16.mxu0 0
  %254 = vmatpush1.bf16.msra.mxu0 0
  %255 = vmatprep.subr.bf16.mxu0 0
  %256 = vmatpush1.bf16.msra.mxu0 0
  %257 = vmatprep.subr.bf16.mxu0 0
  %258 = vmatpush1.bf16.msra.mxu0 0
  %259 = vmatprep.mubr.bf16.mxu0 0
  %260 = vmatmul.mubr.bf16.gmra.mrb[0].mxu0 %v222
  %v261 = vpop.f32.mrb[0].mxu0
  %v262 = vadd.f32 0.0, %v261
  %v263 = vpop.f32.mrb[0].mxu0
  %v264 = vpop.f32.mrb[0].mxu0
  %v265 = vpop.f32.mrb[0].mxu0
  %266 = vdwg.mxu0
  %v267 = vadd.f32 %v226, %v262
  %v268 = vmax.f32 %v267, 0.0
  %v269 = vpack.c.bf16 %v268, %v268
  %s270 = scalar_lea.vmem %s3, 12
  %271 = vst [vmem:[%s270] sm:$0xf] %v269
  %s272 = scalar_lea.vmem %s0, 32
  %v273 = vld [vmem:[%s272] sm:$0xff]
  %274 = vmatprep.subr.bf16.mxu0 0
  %275 = vmatpush1.bf16.msra.mxu0 %v71
  %276 = vmatprep.subr.bf16.mxu0 0
  %277 = vmatpush1.bf16.msra.mxu0 %v72
  %278 = vmatprep.subr.bf16.mxu0 0
  %279 = vmatpush1.bf16.msra.mxu0 %v73
  %280 = vmatprep.subr.bf16.mxu0 0
  %281 = vmatpush1.bf16.msra.mxu0 %v74
  %282 = vmatprep.subr.bf16.mxu0 0
  %283 = vmatpush1.bf16.msra.mxu0 %v75
  %284 = vmatprep.subr.bf16.mxu0 0
  %285 = vmatpush1.bf16.msra.mxu0 %v76
  %286 = vmatprep.subr.bf16.mxu0 0
  %287 = vmatpush1.bf16.msra.mxu0 %v77
  %288 = vmatprep.subr.bf16.mxu0 0
  %289 = vmatpush1.bf16.msra.mxu0 %v78
  %290 = vmatprep.subr.bf16.mxu0 0
  %291 = vmatpush1.bf16.msra.mxu0 0
  %292 = vmatprep.subr.bf16.mxu0 0
  %293 = vmatpush1.bf16.msra.mxu0 0
  %294 = vmatprep.subr.bf16.mxu0 0
  %295 = vmatpush1.bf16.msra.mxu0 0
  %296 = vmatprep.subr.bf16.mxu0 0
  %297 = vmatpush1.bf16.msra.mxu0 0
  %298 = vmatprep.subr.bf16.mxu0 0
  %299 = vmatpush1.bf16.msra.mxu0 0
  %300 = vmatprep.subr.bf16.mxu0 0
  %301 = vmatpush1.bf16.msra.mxu0 0
  %302 = vmatprep.subr.bf16.mxu0 0
  %303 = vmatpush1.bf16.msra.mxu0 0
  %304 = vmatprep.subr.bf16.mxu0 0
  %305 = vmatpush1.bf16.msra.mxu0 0
  %306 = vmatprep.mubr.bf16.mxu0 0
  %307 = vmatmul.mubr.bf16.gmra.mrb[0].mxu0 %v269
  %v308 = vpop.f32.mrb[0].mxu0
  %v309 = vadd.f32 0.0, %v308
  %v310 = vpop.f32.mrb[0].mxu0
  %v311 = vpop.f32.mrb[0].mxu0
  %v312 = vpop.f32.mrb[0].mxu0
  %313 = vdwg.mxu0
  %v314 = vadd.f32 %v273, %v309
  %v315 = vmax.f32 %v314, 0.0
  %v316 = vpack.c.bf16 %v315, %v315
  %s317 = scalar_lea.vmem %s3, 16
  %318 = vst [vmem:[%s317] sm:$0xf] %v316
  %s319 = scalar_lea.vmem %s0, 40
  %v320 = vld [vmem:[%s319] sm:$0xff]
  %321 = vmatprep.subr.bf16.mxu0 0
  %322 = vmatpush1.bf16.msra.mxu0 %v71
  %323 = vmatprep.subr.bf16.mxu0 0
  %324 = vmatpush1.bf16.msra.mxu0 %v72
  %325 = vmatprep.subr.bf16.mxu0 0
  %326 = vmatpush1.bf16.msra.mxu0 %v73
  %327 = vmatprep.subr.bf16.mxu0 0
  %328 = vmatpush1.bf16.msra.mxu0 %v74
  %329 = vmatprep.subr.bf16.mxu0 0
  %330 = vmatpush1.bf16.msra.mxu0 %v75
  %331 = vmatprep.subr.bf16.mxu0 0
  %332 = vmatpush1.bf16.msra.mxu0 %v76
  %333 = vmatprep.subr.bf16.mxu0 0
  %334 = vmatpush1.bf16.msra.mxu0 %v77
  %335 = vmatprep.subr.bf16.mxu0 0
  %336 = vmatpush1.bf16.msra.mxu0 %v78
  %337 = vmatprep.subr.bf16.mxu0 0
  %338 = vmatpush1.bf16.msra.mxu0 0
  %339 = vmatprep.subr.bf16.mxu0 0
  %340 = vmatpush1.bf16.msra.mxu0 0
  %341 = vmatprep.subr.bf16.mxu0 0
  %342 = vmatpush1.bf16.msra.mxu0 0
  %343 = vmatprep.subr.bf16.mxu0 0
  %344 = vmatpush1.bf16.msra.mxu0 0
  %345 = vmatprep.subr.bf16.mxu0 0
  %346 = vmatpush1.bf16.msra.mxu0 0
  %347 = vmatprep.subr.bf16.mxu0 0
  %348 = vmatpush1.bf16.msra.mxu0 0
  %349 = vmatprep.subr.bf16.mxu0 0
  %350 = vmatpush1.bf16.msra.mxu0 0
  %351 = vmatprep.subr.bf16.mxu0 0
  %352 = vmatpush1.bf16.msra.mxu0 0
  %353 = vmatprep.mubr.bf16.mxu0 0
  %354 = vmatmul.mubr.bf16.gmra.mrb[0].mxu0 %v316
  %v355 = vpop.f32.mrb[0].mxu0
  %v356 = vadd.f32 0.0, %v355
  %v357 = vpop.f32.mrb[0].mxu0
  %v358 = vpop.f32.mrb[0].mxu0
  %v359 = vpop.f32.mrb[0].mxu0
  %360 = vdwg.mxu0
  %v361 = vadd.f32 %v320, %v356
  %v362 = vmax.f32 %v361, 0.0
  %v363 = vpack.c.bf16 %v362, %v362
  %s364 = scalar_lea.vmem %s3, 20
  %365 = vst [vmem:[%s364] sm:$0xf] %v363
  %s366 = scalar_lea.vmem %s0, 48
  %v367 = vld [vmem:[%s366] sm:$0xff]
  %368 = vmatprep.subr.bf16.mxu0 0
  %369 = vmatpush1.bf16.msra.mxu0 %v71
  %370 = vmatprep.subr.bf16.mxu0 0
  %371 = vmatpush1.bf16.msra.mxu0 %v72
  %372 = vmatprep.subr.bf16.mxu0 0
  %373 = vmatpush1.bf16.msra.mxu0 %v73
  %374 = vmatprep.subr.bf16.mxu0 0
  %375 = vmatpush1.bf16.msra.mxu0 %v74
  %376 = vmatprep.subr.bf16.mxu0 0
  %377 = vmatpush1.bf16.msra.mxu0 %v75
  %378 = vmatprep.subr.bf16.mxu0 0
  %379 = vmatpush1.bf16.msra.mxu0 %v76
  %380 = vmatprep.subr.bf16.mxu0 0
  %381 = vmatpush1.bf16.msra.mxu0 %v77
  %382 = vmatprep.subr.bf16.mxu0 0
  %383 = vmatpush1.bf16.msra.mxu0 %v78
  %384 = vmatprep.subr.bf16.mxu0 0
  %385 = vmatpush1.bf16.msra.mxu0 0
  %386 = vmatprep.subr.bf16.mxu0 0
  %387 = vmatpush1.bf16.msra.mxu0 0
  %388 = vmatprep.subr.bf16.mxu0 0
  %389 = vmatpush1.bf16.msra.mxu0 0
  %390 = vmatprep.subr.bf16.mxu0 0
  %391 = vmatpush1.bf16.msra.mxu0 0
  %392 = vmatprep.subr.bf16.mxu0 0
  %393 = vmatpush1.bf16.msra.mxu0 0
  %394 = vmatprep.subr.bf16.mxu0 0
  %395 = vmatpush1.bf16.msra.mxu0 0
  %396 = vmatprep.subr.bf16.mxu0 0
  %397 = vmatpush1.bf16.msra.mxu0 0
  %398 = vmatprep.subr.bf16.mxu0 0
  %399 = vmatpush1.bf16.msra.mxu0 0
  %400 = vmatprep.mubr.bf16.mxu0 0
  %401 = vmatmul.mubr.bf16.gmra.mrb[0].mxu0 %v363
  %v402 = vpop.f32.mrb[0].mxu0
  %v403 = vadd.f32 0.0, %v402
  %v404 = vpop.f32.mrb[0].mxu0
  %v405 = vpop.f32.mrb[0].mxu0
  %v406 = vpop.f32.mrb[0].mxu0
  %407 = vdwg.mxu0
  %v408 = vadd.f32 %v367, %v403
  %v409 = vmax.f32 %v408, 0.0
  %v410 = vpack.c.bf16 %v409, %v409
  %s411 = scalar_lea.vmem %s3, 24
  %412 = vst [vmem:[%s411] sm:$0xf] %v410
  %s413 = scalar_lea.vmem %s0, 56
  %v414 = vld [vmem:[%s413] sm:$0xff]
  %415 = vmatprep.subr.bf16.mxu0 0
  %416 = vmatpush1.bf16.msra.mxu0 %v71
  %417 = vmatprep.subr.bf16.mxu0 0
  %418 = vmatpush1.bf16.msra.mxu0 %v72
  %419 = vmatprep.subr.bf16.mxu0 0
  %420 = vmatpush1.bf16.msra.mxu0 %v73
  %421 = vmatprep.subr.bf16.mxu0 0
  %422 = vmatpush1.bf16.msra.mxu0 %v74
  %423 = vmatprep.subr.bf16.mxu0 0
  %424 = vmatpush1.bf16.msra.mxu0 %v75
  %425 = vmatprep.subr.bf16.mxu0 0
  %426 = vmatpush1.bf16.msra.mxu0 %v76
  %427 = vmatprep.subr.bf16.mxu0 0
  %428 = vmatpush1.bf16.msra.mxu0 %v77
  %429 = vmatprep.subr.bf16.mxu0 0
  %430 = vmatpush1.bf16.msra.mxu0 %v78
  %431 = vmatprep.subr.bf16.mxu0 0
  %432 = vmatpush1.bf16.msra.mxu0 0
  %433 = vmatprep.subr.bf16.mxu0 0
  %434 = vmatpush1.bf16.msra.mxu0 0
  %435 = vmatprep.subr.bf16.mxu0 0
  %436 = vmatpush1.bf16.msra.mxu0 0
  %437 = vmatprep.subr.bf16.mxu0 0
  %438 = vmatpush1.bf16.msra.mxu0 0
  %439 = vmatprep.subr.bf16.mxu0 0
  %440 = vmatpush1.bf16.msra.mxu0 0
  %441 = vmatprep.subr.bf16.mxu0 0
  %442 = vmatpush1.bf16.msra.mxu0 0
  %443 = vmatprep.subr.bf16.mxu0 0
  %444 = vmatpush1.bf16.msra.mxu0 0
  %445 = vmatprep.subr.bf16.mxu0 0
  %446 = vmatpush1.bf16.msra.mxu0 0
  %447 = vmatprep.mubr.bf16.mxu0 0
  %448 = vmatmul.mubr.bf16.gmra.mrb[0].mxu0 %v410
  %v449 = vpop.f32.mrb[0].mxu0
  %v450 = vadd.f32 0.0, %v449
  %v451 = vpop.f32.mrb[0].mxu0
  %v452 = vpop.f32.mrb[0].mxu0
  %v453 = vpop.f32.mrb[0].mxu0
  %454 = vdwg.mxu0
  %v455 = vadd.f32 %v414, %v450
  %v456 = vmax.f32 %v455, 0.0
  %v457 = vpack.c.bf16 %v456, %v456
  %s458 = scalar_lea.vmem %s3, 28
  %459 = vst [vmem:[%s458] sm:$0xf] %v457
  %460 = vst [vmem:[#allocation2] sm:$0xf] %v457
  // Predicated region
  $region18: #{rnn_forward_seq.4} parent=0 // pred_check
    _
  $region19: #{rnn_forward_seq.4} parent=0 // pred_check_branch
    %462 = sbr.rel (0) target = $region21
  $region20: #{rnn_forward_seq.4} parent=0 // pred_region
    _
  $region21: #{rnn_forward_seq.4} parent=0 // pred_fallthru
    _
  // Predicated region
  $region22: #{rnn_forward_seq.4} parent=0 // pred_check
    _
  $region23: #{rnn_forward_seq.4} parent=0 // pred_check_branch
    %464 = sbr.rel (0) target = $region25
  $region24: #{rnn_forward_seq.4} parent=0 // pred_region
    _
  $region25: #{rnn_forward_seq.4} parent=0 // pred_fallthru
    _

</llo_original>
